<compile_context>
chip_gen: v7x
topology: tpu7x:2x2x1
jax: 0.10.0
libtpu: 0.0.40
codegen_flags: <defaults>
</compile_context>

<pallas_src>
import functools

import jax
import jax.numpy as jnp
from jax.experimental import pallas as pl
from jax.experimental.pallas import tpu as pltpu

_LANES = 128
_SUBLANES = 8


def _round_up(v, m):
    return ((v + m - 1) // m) * m


def _qnet_kernel(x_ref, w1_ref, b1_ref, w2_ref, b2_ref, w3_ref, b3_ref, o_ref):
    # fc1 + ReLU: MXU matmul with f32 accumulation; bias add + ReLU in f32 on the VPU.
    h1 = jnp.dot(x_ref[...], w1_ref[...], preferred_element_type=jnp.float32)
    h1 = jnp.maximum(h1 + b1_ref[...], 0.0)
    # fc2 + ReLU
    h2 = jnp.dot(h1.astype(w2_ref.dtype), w2_ref[...], preferred_element_type=jnp.float32)
    h2 = jnp.maximum(h2 + b2_ref[...], 0.0)
    # fc3 (no activation); lane-dense (TB, A_pad) store in o_ref.dtype (bf16 by default,
    # halving the padded-output writeback bytes).
    o = jnp.dot(h2.astype(w3_ref.dtype), w3_ref[...], preferred_element_type=jnp.float32)
    o_ref[...] = (o + b3_ref[...]).astype(o_ref.dtype)


@functools.partial(jax.jit, static_argnames=("tile_b", "compute_dtype"))
def qnetwork_forward(x, params, *, tile_b=1024, compute_dtype=jnp.bfloat16):
    """Fused QNetwork forward.

    x:      (B, state_dim) float32
    params: dict with w1 (S,H), b1 (1,H), w2 (H,H), b2 (1,H), w3 (H,A), b3 (1,A)
            (weights stored transposed: (in_features, out_features))
    returns (B, action_dim) float32
    """
    w1, b1 = params["w1"], params["b1"]
    w2, b2 = params["w2"], params["b2"]
    w3, b3 = params["w3"], params["b3"]

    B, S = x.shape
    H = w1.shape[1]
    A = w3.shape[1]

    cdt = jnp.dtype(compute_dtype)
    cdt_bytes = cdt.itemsize

    # --- lane-align hidden / action dims (zero padding is exact through matmul + ReLU) ---
    H_pad = _round_up(H, _LANES)
    A_pad = _round_up(A, _LANES)

    def pad2(a, rows, cols):
        return jnp.pad(a, ((0, rows - a.shape[0]), (0, cols - a.shape[1])))

    w1p = pad2(w1, S, H_pad).astype(cdt)
    w2p = pad2(w2, H_pad, H_pad).astype(cdt)
    w3p = pad2(w3, H_pad, A_pad).astype(cdt)
    b1p = pad2(b1, 1, H_pad).astype(jnp.float32)   # biases / elementwise stay f32
    b2p = pad2(b2, 1, H_pad).astype(jnp.float32)
    b3p = pad2(b3, 1, A_pad).astype(jnp.float32)

    # --- batch tiling: stream x/out, keep weights resident, minimize batch padding ---
    tile_b = max(_round_up(int(tile_b), _SUBLANES), _SUBLANES)  # sublane-safe user tile
    num_tiles = max(pl.cdiv(B, tile_b), 1)
    # v7x has 2 TensorCores: give the "parallel" batch axis >= 2 steps when B permits.
    if num_tiles < 2 and B >= 2 * _SUBLANES:
        num_tiles = 2
    TB = _round_up(pl.cdiv(B, num_tiles), _SUBLANES)   # near-minimal padding, sublane-aligned
    B_pad = _round_up(B, TB)
    grid = (pl.cdiv(B_pad, TB),)

    # Pre-cast x to compute_dtype (halves streamed x bytes in the bf16 path).
    x_p = jnp.pad(x, ((0, B_pad - B), (0, 0))).astype(cdt)

    resident = lambda shape: pl.BlockSpec(shape, lambda i: (0, 0))
    in_specs = [
        pl.BlockSpec((TB, S), lambda i: (i, 0)),      # x: streamed over batch tiles
        resident((S, H_pad)),                         # w1 (VMEM-resident)
        resident((1, H_pad)),                         # b1
        resident((H_pad, H_pad)),                     # w2
        resident((1, H_pad)),                         # b2
        resident((H_pad, A_pad)),                     # w3
        resident((1, A_pad)),                         # b3
    ]
    out_specs = pl.BlockSpec((TB, A_pad), lambda i: (i, 0))   # lane-dense output block

    # --- VMEM budget from actual buffer sizes (double-buffered blocks + f32 intermediates) ---
    block_bytes = 2 * (
        TB * S * cdt_bytes                                   # x tile
        + TB * A_pad * cdt_bytes                             # out tile
        + (S * H_pad + H_pad * H_pad + H_pad * A_pad) * cdt_bytes   # weights
        + (2 * H_pad + A_pad) * 4                            # biases (f32)
    )
    interm_bytes = (2 * TB * H_pad + TB * A_pad) * 4         # h1, h2, o in f32
    vmem_limit = min(2 * (block_bytes + interm_bytes) + (4 << 20), 64 << 20)

    flops = 2 * B_pad * (S * H_pad + H_pad * H_pad + H_pad * A_pad)
    bytes_accessed = (
        B_pad * S * cdt_bytes                                # x
        + B_pad * A_pad * cdt_bytes                          # out
        + (S * H_pad + H_pad * H_pad + H_pad * A_pad) * cdt_bytes
        + (2 * H_pad + A_pad) * 4
    )

    out_padded = pl.pallas_call(
        _qnet_kernel,
        out_shape=jax.ShapeDtypeStruct((B_pad, A_pad), cdt),
        grid=grid,
        in_specs=in_specs,
        out_specs=out_specs,
        compiler_params=pltpu.CompilerParams(
            dimension_semantics=("parallel",),               # shard batch tiles across TCs
            vmem_limit_bytes=int(vmem_limit),
        ),
        cost_estimate=pl.CostEstimate(
            flops=flops, transcendentals=0, bytes_accessed=int(bytes_accessed)
        ),
    )(x_p, w1p, b1p, w2p, b2p, w3p, b3p)

    # Slice off batch / action padding; return f32 regardless of compute dtype.
    return out_padded[:B, :A].astype(jnp.float32)


def init_qnetwork_params(key, state_dim, action_dim, hidden_dim=128):
    """Deterministic init mimicking PyTorch nn.Linear default (uniform +-1/sqrt(fan_in))."""
    keys = jax.random.split(key, 6)

    def linear(kw, kb, fan_in, fan_out):
        bound = 1.0 / jnp.sqrt(jnp.float32(fan_in))
        w = jax.random.uniform(kw, (fan_in, fan_out), jnp.float32, -bound, bound)
        b = jax.random.uniform(kb, (1, fan_out), jnp.float32, -bound, bound)
        return w, b

    w1, b1 = linear(keys[0], keys[1], state_dim, hidden_dim)
    w2, b2 = linear(keys[2], keys[3], hidden_dim, hidden_dim)
    w3, b3 = linear(keys[4], keys[5], hidden_dim, action_dim)
    return {"w1": w1, "b1": b1, "w2": w2, "b2": b2, "w3": w3, "b3": b3}


def qnetwork_reference(x, params):
    """Pure-JAX reference for correctness check."""
    h1 = jnp.maximum(x @ params["w1"] + params["b1"], 0.0)
    h2 = jnp.maximum(h1 @ params["w2"] + params["b2"], 0.0)
    return h2 @ params["w3"] + params["b3"]


if __name__ == "__main__":
    # Small shapes consistent with the module: state_dim=8, action_dim=4, hidden_dim=32, batch=2
    B, STATE_DIM, ACTION_DIM, HIDDEN_DIM = 2, 8, 4, 32

    key = jax.random.PRNGKey(0)
    k_params, k_x, k_x2 = jax.random.split(key, 3)
    params = init_qnetwork_params(k_params, STATE_DIM, ACTION_DIM, HIDDEN_DIM)
    x = jax.random.normal(k_x, (B, STATE_DIM), jnp.float32)
    ref = qnetwork_reference(x, params)

    # f32 path (exact vs reference)
    out_f32 = qnetwork_forward(x, params, compute_dtype=jnp.float32)
    out_f32 = jax.block_until_ready(out_f32)
    assert out_f32.shape == (B, ACTION_DIM)
    assert jnp.allclose(out_f32, ref, atol=1e-5, rtol=1e-5), "f32 Pallas output mismatch"

    # default path: bf16 operands, f32 accumulation — looser tolerance
    out_bf16 = qnetwork_forward(x, params)
    out_bf16 = jax.block_until_ready(out_bf16)
    assert out_bf16.shape == (B, ACTION_DIM)
    assert jnp.allclose(out_bf16, ref, atol=1e-1, rtol=1e-1), "bf16 Pallas output mismatch"

    # multi-tile grid + ragged batch padding (B=40, tile_b=16 -> 3 tiles of 16, 8 rows padded)
    x2 = jax.random.normal(k_x2, (40, STATE_DIM), jnp.float32)
    ref2 = qnetwork_reference(x2, params)
    out2 = qnetwork_forward(x2, params, tile_b=16, compute_dtype=jnp.float32)
    out2 = jax.block_until_ready(out2)
    assert out2.shape == (40, ACTION_DIM)
    assert jnp.allclose(out2, ref2, atol=1e-5, rtol=1e-5), "tiled f32 Pallas output mismatch"

    print("KERNEL_OK")
</pallas_src>

<mosaic_0001>
module attributes {stable_mosaic.version = 11 : i64} {
  func.func @_qnet_kernel(%arg0: i32, %arg1: memref<8x8xf32, #tpu.memory_space<vmem>>, %arg2: memref<8x128xf32, #tpu.memory_space<vmem>>, %arg3: memref<1x128xf32, #tpu.memory_space<vmem>>, %arg4: memref<128x128xf32, #tpu.memory_space<vmem>>, %arg5: memref<1x128xf32, #tpu.memory_space<vmem>>, %arg6: memref<128x128xf32, #tpu.memory_space<vmem>>, %arg7: memref<1x128xf32, #tpu.memory_space<vmem>>, %arg8: memref<8x128xf32, #tpu.memory_space<vmem>>) attributes {dimension_semantics = [#tpu.dimension_semantics<parallel>], iteration_bounds = array<i64: 1>, scalar_prefetch = 0 : i64, scratch_operands = 0 : i64, tpu.core_type = #tpu.core_type<tc>, window_params = [{transform_indices = @transform_0, window_bounds = array<i64: 8, 8>}, {pipeline_mode = #tpu.pipeline_mode<synchronous>, transform_indices = @transform_1, window_bounds = array<i64: 8, 128>}, {pipeline_mode = #tpu.pipeline_mode<synchronous>, transform_indices = @transform_2, window_bounds = array<i64: 1, 128>}, {pipeline_mode = #tpu.pipeline_mode<synchronous>, transform_indices = @transform_3, window_bounds = array<i64: 128, 128>}, {pipeline_mode = #tpu.pipeline_mode<synchronous>, transform_indices = @transform_4, window_bounds = array<i64: 1, 128>}, {pipeline_mode = #tpu.pipeline_mode<synchronous>, transform_indices = @transform_5, window_bounds = array<i64: 128, 128>}, {pipeline_mode = #tpu.pipeline_mode<synchronous>, transform_indices = @transform_6, window_bounds = array<i64: 1, 128>}, {transform_indices = @transform_7, window_bounds = array<i64: 8, 128>}]} {
    %c0 = arith.constant 0 : index
    %c0_0 = arith.constant 0 : index
    %0 = vector.load %arg1[%c0, %c0_0] : memref<8x8xf32, #tpu.memory_space<vmem>>, vector<8x8xf32>
    %c0_1 = arith.constant 0 : index
    %c0_2 = arith.constant 0 : index
    %1 = vector.load %arg2[%c0_1, %c0_2] : memref<8x128xf32, #tpu.memory_space<vmem>>, vector<8x128xf32>
    %cst = arith.constant dense<0.000000e+00> : vector<8x128xf32>
    %2 = tpu.matmul %0, %1, %cst {dimension_numbers = #tpu.dot_dimension_numbers<[1], [0], [0], [1], [0, 0, 1, 1], [], []>} : vector<8x8xf32>, vector<8x128xf32>, vector<8x128xf32> -> vector<8x128xf32>
    %c0_3 = arith.constant 0 : index
    %c0_4 = arith.constant 0 : index
    %3 = vector.load %arg3[%c0_3, %c0_4] : memref<1x128xf32, #tpu.memory_space<vmem>>, vector<1x128xf32>
    %4 = vector.broadcast %3 : vector<1x128xf32> to vector<8x128xf32>
    %5 = arith.addf %2, %4 : vector<8x128xf32>
    %cst_5 = arith.constant 0.000000e+00 : f32
    %6 = vector.broadcast %cst_5 : f32 to vector<8x128xf32>
    %7 = arith.maximumf %5, %6 : vector<8x128xf32>
    %c0_6 = arith.constant 0 : index
    %c0_7 = arith.constant 0 : index
    %8 = vector.load %arg4[%c0_6, %c0_7] : memref<128x128xf32, #tpu.memory_space<vmem>>, vector<128x128xf32>
    %cst_8 = arith.constant dense<0.000000e+00> : vector<8x128xf32>
    %9 = tpu.matmul %7, %8, %cst_8 {dimension_numbers = #tpu.dot_dimension_numbers<[1], [0], [0], [1], [0, 0, 1, 1], [], []>} : vector<8x128xf32>, vector<128x128xf32>, vector<8x128xf32> -> vector<8x128xf32>
    %c0_9 = arith.constant 0 : index
    %c0_10 = arith.constant 0 : index
    %10 = vector.load %arg5[%c0_9, %c0_10] : memref<1x128xf32, #tpu.memory_space<vmem>>, vector<1x128xf32>
    %11 = vector.broadcast %10 : vector<1x128xf32> to vector<8x128xf32>
    %12 = arith.addf %9, %11 : vector<8x128xf32>
    %cst_11 = arith.constant 0.000000e+00 : f32
    %13 = vector.broadcast %cst_11 : f32 to vector<8x128xf32>
    %14 = arith.maximumf %12, %13 : vector<8x128xf32>
    %c0_12 = arith.constant 0 : index
    %c0_13 = arith.constant 0 : index
    %15 = vector.load %arg6[%c0_12, %c0_13] : memref<128x128xf32, #tpu.memory_space<vmem>>, vector<128x128xf32>
    %cst_14 = arith.constant dense<0.000000e+00> : vector<8x128xf32>
    %16 = tpu.matmul %14, %15, %cst_14 {dimension_numbers = #tpu.dot_dimension_numbers<[1], [0], [0], [1], [0, 0, 1, 1], [], []>} : vector<8x128xf32>, vector<128x128xf32>, vector<8x128xf32> -> vector<8x128xf32>
    %c0_15 = arith.constant 0 : index
    %c0_16 = arith.constant 0 : index
    %17 = vector.load %arg7[%c0_15, %c0_16] : memref<1x128xf32, #tpu.memory_space<vmem>>, vector<1x128xf32>
    %18 = vector.broadcast %17 : vector<1x128xf32> to vector<8x128xf32>
    %19 = arith.addf %16, %18 : vector<8x128xf32>
    %c0_17 = arith.constant 0 : index
    %c0_18 = arith.constant 0 : index
    %20 = vector.load %arg8[%c0_17, %c0_18] : memref<8x128xf32, #tpu.memory_space<vmem>>, vector<8x128xf32>
    tpu.vector_store %arg8[%c0_17, %c0_18], %19 {strides = array<i32>} : memref<8x128xf32, #tpu.memory_space<vmem>>, vector<8x128xf32>,
    return
  }
  func.func @transform_0(%arg0: i32) -> (i32, i32) {
    %c0_i32 = arith.constant 0 : i32
    %c0_i32_0 = arith.constant 0 : i32
    return %arg0, %c0_i32 : i32, i32
  }
  func.func @transform_1(%arg0: i32) -> (i32, i32) {
    %c0_i32 = arith.constant 0 : i32
    %c0_i32_0 = arith.constant 0 : i32
    %c0_i32_1 = arith.constant 0 : i32
    return %c0_i32, %c0_i32_0 : i32, i32
  }
  func.func @transform_2(%arg0: i32) -> (i32, i32) {
    %c0_i32 = arith.constant 0 : i32
    %c0_i32_0 = arith.constant 0 : i32
    %c0_i32_1 = arith.constant 0 : i32
    return %c0_i32, %c0_i32_0 : i32, i32
  }
  func.func @transform_3(%arg0: i32) -> (i32, i32) {
    %c0_i32 = arith.constant 0 : i32
    %c0_i32_0 = arith.constant 0 : i32
    %c0_i32_1 = arith.constant 0 : i32
    return %c0_i32, %c0_i32_0 : i32, i32
  }
  func.func @transform_4(%arg0: i32) -> (i32, i32) {
    %c0_i32 = arith.constant 0 : i32
    %c0_i32_0 = arith.constant 0 : i32
    %c0_i32_1 = arith.constant 0 : i32
    return %c0_i32, %c0_i32_0 : i32, i32
  }
  func.func @transform_5(%arg0: i32) -> (i32, i32) {
    %c0_i32 = arith.constant 0 : i32
    %c0_i32_0 = arith.constant 0 : i32
    %c0_i32_1 = arith.constant 0 : i32
    return %c0_i32, %c0_i32_0 : i32, i32
  }
  func.func @transform_6(%arg0: i32) -> (i32, i32) {
    %c0_i32 = arith.constant 0 : i32
    %c0_i32_0 = arith.constant 0 : i32
    %c0_i32_1 = arith.constant 0 : i32
    return %c0_i32, %c0_i32_0 : i32, i32
  }
  func.func @transform_7(%arg0: i32) -> (i32, i32) {
    %c0_i32 = arith.constant 0 : i32
    %c0_i32_0 = arith.constant 0 : i32
    return %arg0, %c0_i32 : i32, i32
  }
}

</mosaic_0001>

<llo_original>
// kernel: qnetwork_forward.1
$region0: #{qnetwork_forward.1}
  #allocation0 [shape = 'u32[]', space=smem, size = 0x4, offset = 0x4, fixed_abs, tag = 'smem constant byte address 0x4 - core index']
  #allocation1 [shape = 'u32[144,128]{1,0:T(1,128)}', space=vmem, size = 0x12000, scoped, tag = 'internal scratch']
  %s0 = inlined_call_operand.vmem [shape: f32[8,8], index: 0, kind: input, shape index: {}]
  %s1 = inlined_call_operand.vmem [shape: f32[8,128], index: 1, kind: input, shape index: {}]
  %s2 = inlined_call_operand.vmem [shape: f32[1,128], index: 2, kind: input, shape index: {}]
  %s3 = inlined_call_operand.vmem [shape: f32[128,128], index: 3, kind: input, shape index: {}]
  %s4 = inlined_call_operand.vmem [shape: f32[1,128], index: 4, kind: input, shape index: {}]
  %s5 = inlined_call_operand.vmem [shape: f32[128,128], index: 5, kind: input, shape index: {}]
  %s6 = inlined_call_operand.vmem [shape: f32[1,128], index: 6, kind: input, shape index: {}]
  %s7 = inlined_call_operand.vmem [shape: f32[8,128], index: 7, kind: output, shape index: {}]
  %s8 = sld [smem:[#allocation0]]
  $region38: #{qnetwork_forward.1} parent=0
    _
  %s10 = ssub.s32 1, %s8
  %s11 = scalar_select 0, %s10, %s8
  // Predicated region
  $region2: #{qnetwork_forward.1} parent=0 // pred_check
    _
  $region3: #{qnetwork_forward.1} parent=0 // pred_check_branch
    %13 = sbr.rel (0) target = $region5
  $region4: #{qnetwork_forward.1} parent=0 // pred_region
    _
  $region5: #{qnetwork_forward.1} parent=0 // pred_fallthru
    _
  // Predicated region
  $region6: #{qnetwork_forward.1} parent=0 // pred_check
    _
  $region7: #{qnetwork_forward.1} parent=0 // pred_check_branch
    %15 = sbr.rel (0) target = $region9
  $region8: #{qnetwork_forward.1} parent=0 // pred_region
    _
  $region9: #{qnetwork_forward.1} parent=0 // pred_fallthru
    _
  // Predicated region
  $region10: #{qnetwork_forward.1} parent=0 // pred_check
    _
  $region11: #{qnetwork_forward.1} parent=0 // pred_check_branch
    %17 = sbr.rel (0) target = $region13
  $region12: #{qnetwork_forward.1} parent=0 // pred_region
    _
  $region13: #{qnetwork_forward.1} parent=0 // pred_fallthru
    _
  // Predicated region
  $region14: #{qnetwork_forward.1} parent=0 // pred_check
    _
  $region15: #{qnetwork_forward.1} parent=0 // pred_check_branch
    %19 = sbr.rel (0) target = $region17
  $region16: #{qnetwork_forward.1} parent=0 // pred_region
    _
  $region17: #{qnetwork_forward.1} parent=0 // pred_fallthru
    _
  // Predicated region
  $region18: #{qnetwork_forward.1} parent=0 // pred_check
    _
  $region19: #{qnetwork_forward.1} parent=0 // pred_check_branch
    %21 = sbr.rel (0) target = $region21
  $region20: #{qnetwork_forward.1} parent=0 // pred_region
    _
  $region21: #{qnetwork_forward.1} parent=0 // pred_fallthru
    _
  // Predicated region
  $region22: #{qnetwork_forward.1} parent=0 // pred_check
    _
  $region23: #{qnetwork_forward.1} parent=0 // pred_check_branch
    %23 = sbr.rel (0) target = $region25
  $region24: #{qnetwork_forward.1} parent=0 // pred_region
    _
  $region25: #{qnetwork_forward.1} parent=0 // pred_fallthru
    _
  // Predicated region
  $region26: #{qnetwork_forward.1} parent=0 // pred_check
    _
  $region27: #{qnetwork_forward.1} parent=0 // pred_check_branch
    %25 = sbr.rel (0) target = $region29
  $region28: #{qnetwork_forward.1} parent=0 // pred_region
    _
  $region29: #{qnetwork_forward.1} parent=0 // pred_fallthru
    _
  %v26 = vld [vmem:[%s0] sm:$0xff]
  %v27 = vld [vmem:[%s1] sm:$0xff]
  %v28 = vld [vmem:[%s2] sm:$0x1]
  %v30 = vlaneseq
  %v31 = vshrl.u32 %v30, 7
  %v32 = vsub.s32 0, %v31
  %v33 = vrot.slane %v28, %v32
  %vm35 = vcmask 64512
  %v37 = vsel %vm35, %v26, 0
  %39 = vmatprep.subr.mxu0 0.0
  %40 = vmatpush1.msra.mxu0 %v27
  %41 = vmatprep.subr.mxu0 0.0
  %42 = vmatpush1.msra.mxu0 0.0
  %43 = vmatprep.subr.mxu0 0.0
  %44 = vmatpush1.msra.mxu0 0.0
  %45 = vmatprep.subr.mxu0 0.0
  %46 = vmatpush1.msra.mxu0 0.0
  %47 = vmatprep.subr.mxu0 0.0
  %48 = vmatpush1.msra.mxu0 0.0
  %49 = vmatprep.subr.mxu0 0.0
  %50 = vmatpush1.msra.mxu0 0.0
  %51 = vmatprep.subr.mxu0 0.0
  %52 = vmatpush1.msra.mxu0 0.0
  %53 = vmatprep.subr.mxu0 0.0
  %54 = vmatpush1.msra.mxu0 0.0
  %55 = vmatprep.subr.mxu0 0.0
  %56 = vmatpush1.msra.mxu0 0.0
  %57 = vmatprep.subr.mxu0 0.0
  %58 = vmatpush1.msra.mxu0 0.0
  %59 = vmatprep.subr.mxu0 0.0
  %60 = vmatpush1.msra.mxu0 0.0
  %61 = vmatprep.subr.mxu0 0.0
  %62 = vmatpush1.msra.mxu0 0.0
  %63 = vmatprep.subr.mxu0 0.0
  %64 = vmatpush1.msra.mxu0 0.0
  %65 = vmatprep.subr.mxu0 0.0
  %66 = vmatpush1.msra.mxu0 0.0
  %67 = vmatprep.subr.mxu0 0.0
  %68 = vmatpush1.msra.mxu0 0.0
  %69 = vmatprep.subr.mxu0 0.0
  %70 = vmatpush1.msra.mxu0 0.0
  %71 = vmatprep.subr.mxu0 0.0
  %72 = vmatpush1.msra.mxu0 0.0
  %73 = vmatprep.subr.mxu0 0.0
  %74 = vmatpush1.msra.mxu0 0.0
  %75 = vmatprep.subr.mxu0 0.0
  %76 = vmatpush1.msra.mxu0 0.0
  %77 = vmatprep.subr.mxu0 0.0
  %78 = vmatpush1.msra.mxu0 0.0
  %79 = vmatprep.subr.mxu0 0.0
  %80 = vmatpush1.msra.mxu0 0.0
  %81 = vmatprep.subr.mxu0 0.0
  %82 = vmatpush1.msra.mxu0 0.0
  %83 = vmatprep.subr.mxu0 0.0
  %84 = vmatpush1.msra.mxu0 0.0
  %85 = vmatprep.subr.mxu0 0.0
  %86 = vmatpush1.msra.mxu0 0.0
  %87 = vmatprep.subr.mxu0 0.0
  %88 = vmatpush1.msra.mxu0 0.0
  %89 = vmatprep.subr.mxu0 0.0
  %90 = vmatpush1.msra.mxu0 0.0
  %91 = vmatprep.subr.mxu0 0.0
  %92 = vmatpush1.msra.mxu0 0.0
  %93 = vmatprep.subr.mxu0 0.0
  %94 = vmatpush1.msra.mxu0 0.0
  %95 = vmatprep.subr.mxu0 0.0
  %96 = vmatpush1.msra.mxu0 0.0
  %97 = vmatprep.subr.mxu0 0.0
  %98 = vmatpush1.msra.mxu0 0.0
  %99 = vmatprep.subr.mxu0 0.0
  %100 = vmatpush1.msra.mxu0 0.0
  %101 = vmatprep.subr.mxu0 0.0
  %102 = vmatpush1.msra.mxu0 0.0
  %103 = vmatprep.mubr.f32.mxu0 0.0
  %104 = vmatmul.mubr.f32.gmra.mrb[0].mxu0 %v37
  %v105 = vpop.f32.mrb[0].mxu0
  %v106 = vadd.f32 %v33, %v105
  %v107 = vpop.f32.mrb[0].mxu0
  %108 = vdwg.mxu0
  %v109 = vmax.f32 %v106, 0.0
  %v110 = vld [vmem:[%s3] sm:$0xff]
  %v111 = vld [vmem:[%s3 + $0x8] sm:$0xff]
  %v112 = vld [vmem:[%s3 + $0x10] sm:$0xff]
  %v113 = vld [vmem:[%s3 + $0x18] sm:$0xff]
  %v114 = vld [vmem:[%s3 + $0x20] sm:$0xff]
  %v115 = vld [vmem:[%s3 + $0x28] sm:$0xff]
  %v116 = vld [vmem:[%s3 + $0x30] sm:$0xff]
  %v117 = vld [vmem:[%s3 + $0x38] sm:$0xff]
  %v118 = vld [vmem:[%s3 + $0x40] sm:$0xff]
  %v119 = vld [vmem:[%s3 + $0x48] sm:$0xff]
  %v120 = vld [vmem:[%s3 + $0x50] sm:$0xff]
  %v121 = vld [vmem:[%s3 + $0x58] sm:$0xff]
  %v122 = vld [vmem:[%s3 + $0x60] sm:$0xff]
  %v123 = vld [vmem:[%s3 + $0x68] sm:$0xff]
  %v124 = vld [vmem:[%s3 + $0x70] sm:$0xff]
  %v125 = vld [vmem:[%s3 + $0x78] sm:$0xff]
  %v126 = vld [vmem:[%s4] sm:$0x1]
  %v128 = vlaneseq
  %v129 = vshrl.u32 %v128, 7
  %v130 = vsub.s32 0, %v129
  %v131 = vrot.slane %v126, %v130
  %133 = vmatprep.subr.mxu0 0.0
  %134 = vmatpush1.msra.mxu0 %v110
  %135 = vmatprep.subr.mxu0 0.0
  %136 = vmatpush1.msra.mxu0 %v111
  %137 = vmatprep.subr.mxu0 0.0
  %138 = vmatpush1.msra.mxu0 %v112
  %139 = vmatprep.subr.mxu0 0.0
  %140 = vmatpush1.msra.mxu0 %v113
  %141 = vmatprep.subr.mxu0 0.0
  %142 = vmatpush1.msra.mxu0 %v114
  %143 = vmatprep.subr.mxu0 0.0
  %144 = vmatpush1.msra.mxu0 %v115
  %145 = vmatprep.subr.mxu0 0.0
  %146 = vmatpush1.msra.mxu0 %v116
  %147 = vmatprep.subr.mxu0 0.0
  %148 = vmatpush1.msra.mxu0 %v117
  %149 = vmatprep.subr.mxu0 0.0
  %150 = vmatpush1.msra.mxu0 %v118
  %151 = vmatprep.subr.mxu0 0.0
  %152 = vmatpush1.msra.mxu0 %v119
  %153 = vmatprep.subr.mxu0 0.0
  %154 = vmatpush1.msra.mxu0 %v120
  %155 = vmatprep.subr.mxu0 0.0
  %156 = vmatpush1.msra.mxu0 %v121
  %157 = vmatprep.subr.mxu0 0.0
  %158 = vmatpush1.msra.mxu0 %v122
  %159 = vmatprep.subr.mxu0 0.0
  %160 = vmatpush1.msra.mxu0 %v123
  %161 = vmatprep.subr.mxu0 0.0
  %162 = vmatpush1.msra.mxu0 %v124
  %163 = vmatprep.subr.mxu0 0.0
  %164 = vmatpush1.msra.mxu0 %v125
  %165 = vmatprep.subr.mxu0 0.0
  %166 = vmatpush1.msra.mxu0 0.0
  %167 = vmatprep.subr.mxu0 0.0
  %168 = vmatpush1.msra.mxu0 0.0
  %169 = vmatprep.subr.mxu0 0.0
  %170 = vmatpush1.msra.mxu0 0.0
  %171 = vmatprep.subr.mxu0 0.0
  %172 = vmatpush1.msra.mxu0 0.0
  %173 = vmatprep.subr.mxu0 0.0
  %174 = vmatpush1.msra.mxu0 0.0
  %175 = vmatprep.subr.mxu0 0.0
  %176 = vmatpush1.msra.mxu0 0.0
  %177 = vmatprep.subr.mxu0 0.0
  %178 = vmatpush1.msra.mxu0 0.0
  %179 = vmatprep.subr.mxu0 0.0
  %180 = vmatpush1.msra.mxu0 0.0
  %181 = vmatprep.subr.mxu0 0.0
  %182 = vmatpush1.msra.mxu0 0.0
  %183 = vmatprep.subr.mxu0 0.0
  %184 = vmatpush1.msra.mxu0 0.0
  %185 = vmatprep.subr.mxu0 0.0
  %186 = vmatpush1.msra.mxu0 0.0
  %187 = vmatprep.subr.mxu0 0.0
  %188 = vmatpush1.msra.mxu0 0.0
  %189 = vmatprep.subr.mxu0 0.0
  %190 = vmatpush1.msra.mxu0 0.0
  %191 = vmatprep.subr.mxu0 0.0
  %192 = vmatpush1.msra.mxu0 0.0
  %193 = vmatprep.subr.mxu0 0.0
  %194 = vmatpush1.msra.mxu0 0.0
  %195 = vmatprep.subr.mxu0 0.0
  %196 = vmatpush1.msra.mxu0 0.0
  %197 = vmatprep.mubr.f32.mxu0 0.0
  %198 = vmatmul.mubr.f32.gmra.mrb[0].mxu0 %v109
  %v199 = vpop.f32.mrb[0].mxu0
  %v200 = vadd.f32 %v131, %v199
  %v201 = vpop.f32.mrb[0].mxu0
  %202 = vdwg.mxu0
  %v203 = vmax.f32 %v200, 0.0
  %v204 = vld [vmem:[%s5] sm:$0xff]
  %v205 = vld [vmem:[%s5 + $0x8] sm:$0xff]
  %v206 = vld [vmem:[%s5 + $0x10] sm:$0xff]
  %v207 = vld [vmem:[%s5 + $0x18] sm:$0xff]
  %v208 = vld [vmem:[%s5 + $0x20] sm:$0xff]
  %v209 = vld [vmem:[%s5 + $0x28] sm:$0xff]
  %v210 = vld [vmem:[%s5 + $0x30] sm:$0xff]
  %v211 = vld [vmem:[%s5 + $0x38] sm:$0xff]
  %v212 = vld [vmem:[%s5 + $0x40] sm:$0xff]
  %v213 = vld [vmem:[%s5 + $0x48] sm:$0xff]
  %v214 = vld [vmem:[%s5 + $0x50] sm:$0xff]
  %v215 = vld [vmem:[%s5 + $0x58] sm:$0xff]
  %v216 = vld [vmem:[%s5 + $0x60] sm:$0xff]
  %v217 = vld [vmem:[%s5 + $0x68] sm:$0xff]
  %v218 = vld [vmem:[%s5 + $0x70] sm:$0xff]
  %v219 = vld [vmem:[%s5 + $0x78] sm:$0xff]
  %v220 = vld [vmem:[%s6] sm:$0x1]
  %v222 = vlaneseq
  %v223 = vshrl.u32 %v222, 7
  %v224 = vsub.s32 0, %v223
  %v225 = vrot.slane %v220, %v224
  %227 = vmatprep.subr.mxu0 0.0
  %228 = vmatpush1.msra.mxu0 %v204
  %229 = vmatprep.subr.mxu0 0.0
  %230 = vmatpush1.msra.mxu0 %v205
  %231 = vmatprep.subr.mxu0 0.0
  %232 = vmatpush1.msra.mxu0 %v206
  %233 = vmatprep.subr.mxu0 0.0
  %234 = vmatpush1.msra.mxu0 %v207
  %235 = vmatprep.subr.mxu0 0.0
  %236 = vmatpush1.msra.mxu0 %v208
  %237 = vmatprep.subr.mxu0 0.0
  %238 = vmatpush1.msra.mxu0 %v209
  %239 = vmatprep.subr.mxu0 0.0
  %240 = vmatpush1.msra.mxu0 %v210
  %241 = vmatprep.subr.mxu0 0.0
  %242 = vmatpush1.msra.mxu0 %v211
  %243 = vmatprep.subr.mxu0 0.0
  %244 = vmatpush1.msra.mxu0 %v212
  %245 = vmatprep.subr.mxu0 0.0
  %246 = vmatpush1.msra.mxu0 %v213
  %247 = vmatprep.subr.mxu0 0.0
  %248 = vmatpush1.msra.mxu0 %v214
  %249 = vmatprep.subr.mxu0 0.0
  %250 = vmatpush1.msra.mxu0 %v215
  %251 = vmatprep.subr.mxu0 0.0
  %252 = vmatpush1.msra.mxu0 %v216
  %253 = vmatprep.subr.mxu0 0.0
  %254 = vmatpush1.msra.mxu0 %v217
  %255 = vmatprep.subr.mxu0 0.0
  %256 = vmatpush1.msra.mxu0 %v218
  %257 = vmatprep.subr.mxu0 0.0
  %258 = vmatpush1.msra.mxu0 %v219
  %259 = vmatprep.subr.mxu0 0.0
  %260 = vmatpush1.msra.mxu0 0.0
  %261 = vmatprep.subr.mxu0 0.0
  %262 = vmatpush1.msra.mxu0 0.0
  %263 = vmatprep.subr.mxu0 0.0
  %264 = vmatpush1.msra.mxu0 0.0
  %265 = vmatprep.subr.mxu0 0.0
  %266 = vmatpush1.msra.mxu0 0.0
  %267 = vmatprep.subr.mxu0 0.0
  %268 = vmatpush1.msra.mxu0 0.0
  %269 = vmatprep.subr.mxu0 0.0
  %270 = vmatpush1.msra.mxu0 0.0
  %271 = vmatprep.subr.mxu0 0.0
  %272 = vmatpush1.msra.mxu0 0.0
  %273 = vmatprep.subr.mxu0 0.0
  %274 = vmatpush1.msra.mxu0 0.0
  %275 = vmatprep.subr.mxu0 0.0
  %276 = vmatpush1.msra.mxu0 0.0
  %277 = vmatprep.subr.mxu0 0.0
  %278 = vmatpush1.msra.mxu0 0.0
  %279 = vmatprep.subr.mxu0 0.0
  %280 = vmatpush1.msra.mxu0 0.0
  %281 = vmatprep.subr.mxu0 0.0
  %282 = vmatpush1.msra.mxu0 0.0
  %283 = vmatprep.subr.mxu0 0.0
  %284 = vmatpush1.msra.mxu0 0.0
  %285 = vmatprep.subr.mxu0 0.0
  %286 = vmatpush1.msra.mxu0 0.0
  %287 = vmatprep.subr.mxu0 0.0
  %288 = vmatpush1.msra.mxu0 0.0
  %289 = vmatprep.subr.mxu0 0.0
  %290 = vmatpush1.msra.mxu0 0.0
  %291 = vmatprep.mubr.f32.mxu0 0.0
  %292 = vmatmul.mubr.f32.gmra.mrb[0].mxu0 %v203
  %v293 = vpop.f32.mrb[0].mxu0
  %v294 = vadd.f32 %v225, %v293
  %v295 = vpop.f32.mrb[0].mxu0
  %296 = vdwg.mxu0
  %297 = vst [vmem:[%s7] sm:$0xff] %v294
  // Predicated region
  $region30: #{qnetwork_forward.1} parent=0 // pred_check
    _
  $region31: #{qnetwork_forward.1} parent=0 // pred_check_branch
    %299 = sbr.rel (0) target = $region33
  $region32: #{qnetwork_forward.1} parent=0 // pred_region
    _
  $region33: #{qnetwork_forward.1} parent=0 // pred_fallthru
    _
  // Predicated region
  $region34: #{qnetwork_forward.1} parent=0 // pred_check
    _
  $region35: #{qnetwork_forward.1} parent=0 // pred_check_branch
    %301 = sbr.rel (0) target = $region37
  $region36: #{qnetwork_forward.1} parent=0 // pred_region
    _
  $region37: #{qnetwork_forward.1} parent=0 // pred_fallthru
    _

</llo_original>
